<compile_context>
chip_gen: v7x
topology: tpu7x:2x2x1
jax: 0.10.0
libtpu: 0.0.40
codegen_flags: <defaults>
</compile_context>

<pallas_src>
import jax
import jax.numpy as jnp
from jax import lax
from jax.experimental import pallas as pl
from jax.experimental.pallas import tpu as pltpu


def _nocluster_kernel(bag_ids_ref, feats_ref, emb_ref, wt_ref, logdist_ref, out_ref):
    i = pl.program_id(0)
    tm = out_ref.shape[0]
    L = feats_ref.shape[1]
    V = emb_ref.shape[0]

    # --- EmbeddingBag(mode='mean') for the TM bags of this grid step (MXU) ----
    # seg[m, j] = 1 if feature j belongs to global bag (i*tm + m), else 0.
    row_ids = lax.broadcasted_iota(jnp.int32, (tm, L), 0) + i * tm
    seg = (bag_ids_ref[...] == row_ids).astype(jnp.float32)          # (tm, L)

    # Bag lengths & mean scaling. Empty / padded bags -> count 0 -> zero mean,
    # matching PyTorch EmbeddingBag 'mean' behavior for empty bags.
    cnt = jnp.sum(seg, axis=-1, keepdims=True)                        # (tm, 1)
    inv = pl.reciprocal(jnp.maximum(cnt, 1.0), approx=True)           # EUP slot
    seg = seg * inv                                                    # mean weights

    # One-hot over the vocab, built (V, L) so it broadcasts from the (1, L) ref.
    vocab_ids = lax.broadcasted_iota(jnp.int32, (V, L), 0)
    onehot_t = (feats_ref[...] == vocab_ids).astype(jnp.float32)      # (V, L)

    # Per-bag mean weights over the vocab, then the bag means (two MXU matmuls).
    bagw = jnp.dot(seg, onehot_t.T, preferred_element_type=jnp.float32)        # (tm, V)
    means = jnp.dot(bagw.astype(emb_ref.dtype), emb_ref[...],
                    preferred_element_type=jnp.float32)                        # (tm, E)

    # TODO(synk): F.dropout is applied in eval mode (identity); train-mode
    # stochastic dropout would need pltpu.prng_* and is omitted for determinism.

    # --- linear (no bias, native weight dtype on the MXU) + log prior ---------
    scores = jnp.dot(means.astype(wt_ref.dtype), wt_ref[...],
                     preferred_element_type=jnp.float32)                       # (tm, TN)
    out_ref[...] = (scores + logdist_ref[...]).astype(out_ref.dtype)


def _round_up(x, m):
    return ((int(x) + m - 1) // m) * m


def _vmem_budget_bytes():
    """Generation-aware scoped-VMEM ceiling (leave compiler headroom on v7x)."""
    kind = ""
    try:
        kind = jax.devices()[0].device_kind.lower()
    except Exception:
        pass
    if "v7" in kind:
        return 56 << 20        # 64 MiB physical on v7x -> keep headroom
    return 100 << 20           # 128 MiB physical on v4/v5e/v5p/v6e


def nocluster_forward(feature_seq, offsets, word_emb, linear_w, label_distribution,
                      *, bag_tile=256):
    """noCluster.forward, type='train', bag_weighting='none' branch."""
    num_bags = int(offsets.shape[0])
    total = int(feature_seq.shape[0])
    word_size, emblen = word_emb.shape
    type_size = linear_w.shape[0]

    # Tile sizes: fill the MXU M dim (never padding bags past the next multiple
    # of 8 beyond what exists); lane-dense K / N dims.
    tm = max(8, min(_round_up(bag_tile, 8), _round_up(num_bags, 8)))
    num_bags_p = _round_up(num_bags, tm)
    l_pad = _round_up(max(total, 1), 128)
    e_pad = _round_up(emblen, 128)
    tn = _round_up(type_size, 128)
    v_pad = _round_up(word_size, 8)

    # Per-feature bag id (features of bag m live in [offsets[m], offsets[m+1])).
    # Padding features get bag id -1 so they never match any bag row.
    pos = jnp.arange(total, dtype=jnp.int32)
    bag_ids = (jnp.searchsorted(offsets.astype(jnp.int32), pos, side="right") - 1
               ).astype(jnp.int32)
    bag_ids_p = jnp.full((1, l_pad), -1, jnp.int32).at[0, :total].set(bag_ids)
    feats_p = jnp.zeros((1, l_pad), jnp.int32).at[0, :total].set(
        feature_seq.astype(jnp.int32))

    # Lane-dense padded table / weights / prior (native dtypes preserved).
    emb_p = jnp.zeros((v_pad, e_pad), word_emb.dtype).at[:word_size, :emblen].set(word_emb)
    wt_p = jnp.zeros((e_pad, tn), linear_w.dtype).at[:emblen, :type_size].set(linear_w.T)
    # label_distribution must be strictly positive (else log -> -inf), as in the module.
    logdist_p = jnp.zeros((1, tn), jnp.float32).at[0, :type_size].set(
        jnp.log(label_distribution.astype(jnp.float32)))

    # VMEM budget: single-resident constants + double-buffered output block +
    # in-kernel temporaries, clamped to a generation-aware ceiling.
    resident = (emb_p.size * emb_p.dtype.itemsize + wt_p.size * wt_p.dtype.itemsize
                + logdist_p.size * 4 + 2 * l_pad * 4)
    temps = 4 * (tm * l_pad + 2 * v_pad * l_pad + tm * v_pad + tm * e_pad + tm * tn)
    need = resident + 2 * tm * tn * 4 + temps + (8 << 20)
    vmem_limit = int(min(max(need, 16 << 20), _vmem_budget_bytes()))

    # Grid-invariant operands: unblocked whole-array VMEM residents (no per-step
    # double-buffering). Only the output is blocked over the bag-tile grid.
    # TODO(synk): for vocabularies whose table does not fit VMEM, keep the table
    # in HBM (memory_space=pl.ANY) and DMA only the rows touched by each bag tile.
    # TODO(synk): for very large type_size, add a second "parallel" grid axis over
    # output-column tiles so the weight/output blocks stay bounded.
    vmem_spec = pl.BlockSpec(memory_space=pltpu.MemorySpace.VMEM)

    out_padded = pl.pallas_call(
        _nocluster_kernel,
        grid=(num_bags_p // tm,),
        in_specs=[vmem_spec] * 5,
        out_specs=pl.BlockSpec((tm, tn), lambda i: (i, 0)),
        out_shape=jax.ShapeDtypeStruct((num_bags_p, tn), jnp.float32),
        compiler_params=pltpu.CompilerParams(
            dimension_semantics=("parallel",),      # disjoint output rows per step
            vmem_limit_bytes=vmem_limit),
    )(bag_ids_p, feats_p, emb_p, wt_p, logdist_p)

    # Slice off bag padding and lane padding.
    return out_padded[:num_bags, :type_size]


def _reference_forward(feature_seq, offsets, word_emb, linear_w, label_distribution):
    """Pure-JAX reference of the same forward path."""
    total = feature_seq.shape[0]
    starts = offsets.tolist()
    ends = offsets[1:].tolist() + [int(total)]
    gathered = word_emb[feature_seq]                     # (total, emblen)
    bags = []
    for s, e in zip(starts, ends):
        if e > s:
            bags.append(gathered[s:e].mean(axis=0))
        else:
            bags.append(jnp.zeros((word_emb.shape[1],), word_emb.dtype))
    men = jnp.stack(bags)                                # (num_bags, emblen)
    return men @ linear_w.T + jnp.log(label_distribution)[None, :]


if __name__ == "__main__":
    # Small, deterministic shapes consistent with the module's __init__.
    emblen, word_size, type_size = 32, 64, 16
    num_bags, seq_len = 4, 12

    key = jax.random.PRNGKey(0)
    k_emb, k_lin, k_feat, k_dist = jax.random.split(key, 4)

    # nn.Embedding weight (shared with EmbeddingBag).
    word_emb = jax.random.normal(k_emb, (word_size, emblen), jnp.float32)
    # Module zeros linear.weight in __init__; use non-zero deterministic weights
    # (as if load_linear_weights was called) so the matmul path is exercised.
    linear_w = jax.random.normal(k_lin, (type_size, emblen), jnp.float32) * 0.1
    # label_distribution: strictly-positive, deterministic.
    label_distribution = jax.nn.softmax(
        jax.random.normal(k_dist, (type_size,), jnp.float32))

    feature_seq = jax.random.randint(k_feat, (seq_len,), 0, word_size, jnp.int32)
    offsets = jnp.array([0, 3, 5, 9], jnp.int32)          # ragged bags: 3, 2, 4, 3

    out = nocluster_forward(feature_seq, offsets, word_emb, linear_w,
                            label_distribution)
    out = jax.block_until_ready(out)

    ref = _reference_forward(feature_seq, offsets, word_emb, linear_w,
                             label_distribution)

    assert out.shape == (num_bags, type_size)
    assert jnp.allclose(out, ref, atol=5e-3, rtol=5e-3), (out, ref)
    print("KERNEL_OK")
</pallas_src>

<mosaic_0001>
module attributes {stable_mosaic.version = 11 : i64} {
  func.func @_nocluster_kernel(%arg0: i32, %arg1: memref<1x128xi32, #tpu.memory_space<vmem>>, %arg2: memref<1x128xi32, #tpu.memory_space<vmem>>, %arg3: memref<64x128xf32, #tpu.memory_space<vmem>>, %arg4: memref<128x128xf32, #tpu.memory_space<vmem>>, %arg5: memref<1x128xf32, #tpu.memory_space<vmem>>, %arg6: memref<8x128xf32, #tpu.memory_space<vmem>>) attributes {dimension_semantics = [#tpu.dimension_semantics<parallel>], iteration_bounds = array<i64: 1>, scalar_prefetch = 0 : i64, scratch_operands = 0 : i64, tpu.core_type = #tpu.core_type<tc>, window_params = [{pipeline_mode = #tpu.pipeline_mode<synchronous>, transform_indices = @transform_0, window_bounds = array<i64: 1, 128>}, {pipeline_mode = #tpu.pipeline_mode<synchronous>, transform_indices = @transform_1, window_bounds = array<i64: 1, 128>}, {pipeline_mode = #tpu.pipeline_mode<synchronous>, transform_indices = @transform_2, window_bounds = array<i64: 64, 128>}, {pipeline_mode = #tpu.pipeline_mode<synchronous>, transform_indices = @transform_3, window_bounds = array<i64: 128, 128>}, {pipeline_mode = #tpu.pipeline_mode<synchronous>, transform_indices = @transform_4, window_bounds = array<i64: 1, 128>}, {transform_indices = @transform_5, window_bounds = array<i64: 8, 128>}]} {
    %0 = tpu.iota {dimensions = array<i32: 0>} : vector<8x128xi32>
    %c8_i32 = arith.constant 8 : i32
    %1 = arith.muli %arg0, %c8_i32 : i32
    %2 = vector.broadcast %1 : i32 to vector<8x128xi32>
    %3 = arith.addi %0, %2 : vector<8x128xi32>
    %c0 = arith.constant 0 : index
    %c0_0 = arith.constant 0 : index
    %4 = vector.load %arg1[%c0, %c0_0] : memref<1x128xi32, #tpu.memory_space<vmem>>, vector<1x128xi32>
    %5 = vector.broadcast %4 : vector<1x128xi32> to vector<8x128xi32>
    %6 = arith.cmpi eq, %5, %3 : vector<8x128xi32>
    %7 = arith.extui %6 : vector<8x128xi1> to vector<8x128xi32>
    %8 = arith.sitofp %7 : vector<8x128xi32> to vector<8x128xf32>
    %cst = arith.constant dense<0.000000e+00> : vector<8xf32>
    %9 = vector.multi_reduction <add>, %8, %cst [1] : vector<8x128xf32> to vector<8xf32>
    %10 = vector.shape_cast %9 : vector<8xf32> to vector<8x1xf32>
    %cst_1 = arith.constant 1.000000e+00 : f32
    %11 = vector.broadcast %cst_1 : f32 to vector<8x1xf32>
    %12 = arith.maximumf %10, %11 : vector<8x1xf32>
    %13 = tpu.reciprocal %12 {approx = true} : vector<8x1xf32> -> vector<8x1xf32>
    %14 = vector.broadcast %13 : vector<8x1xf32> to vector<8x128xf32>
    %15 = arith.mulf %8, %14 : vector<8x128xf32>
    %16 = tpu.iota {dimensions = array<i32: 0>} : vector<64x128xi32>
    %c0_2 = arith.constant 0 : index
    %c0_3 = arith.constant 0 : index
    %17 = vector.load %arg2[%c0_2, %c0_3] : memref<1x128xi32, #tpu.memory_space<vmem>>, vector<1x128xi32>
    %18 = vector.broadcast %17 : vector<1x128xi32> to vector<64x128xi32>
    %19 = arith.cmpi eq, %18, %16 : vector<64x128xi32>
    %20 = arith.extui %19 : vector<64x128xi1> to vector<64x128xi32>
    %21 = arith.sitofp %20 : vector<64x128xi32> to vector<64x128xf32>
    %22 = tpu.transpose %21, [1, 0] : vector<64x128xf32> -> vector<128x64xf32>
    %cst_4 = arith.constant dense<0.000000e+00> : vector<8x64xf32>
    %23 = tpu.matmul %15, %22, %cst_4 {dimension_numbers = #tpu.dot_dimension_numbers<[1], [0], [0], [1], [0, 0, 1, 1], [], []>} : vector<8x128xf32>, vector<128x64xf32>, vector<8x64xf32> -> vector<8x64xf32>
    %c0_5 = arith.constant 0 : index
    %c0_6 = arith.constant 0 : index
    %24 = vector.load %arg3[%c0_5, %c0_6] : memref<64x128xf32, #tpu.memory_space<vmem>>, vector<64x128xf32>
    %cst_7 = arith.constant dense<0.000000e+00> : vector<8x128xf32>
    %25 = tpu.matmul %23, %24, %cst_7 {dimension_numbers = #tpu.dot_dimension_numbers<[1], [0], [0], [1], [0, 0, 1, 1], [], []>} : vector<8x64xf32>, vector<64x128xf32>, vector<8x128xf32> -> vector<8x128xf32>
    %c0_8 = arith.constant 0 : index
    %c0_9 = arith.constant 0 : index
    %26 = vector.load %arg4[%c0_8, %c0_9] : memref<128x128xf32, #tpu.memory_space<vmem>>, vector<128x128xf32>
    %cst_10 = arith.constant dense<0.000000e+00> : vector<8x128xf32>
    %27 = tpu.matmul %25, %26, %cst_10 {dimension_numbers = #tpu.dot_dimension_numbers<[1], [0], [0], [1], [0, 0, 1, 1], [], []>} : vector<8x128xf32>, vector<128x128xf32>, vector<8x128xf32> -> vector<8x128xf32>
    %c0_11 = arith.constant 0 : index
    %c0_12 = arith.constant 0 : index
    %28 = vector.load %arg5[%c0_11, %c0_12] : memref<1x128xf32, #tpu.memory_space<vmem>>, vector<1x128xf32>
    %29 = vector.broadcast %28 : vector<1x128xf32> to vector<8x128xf32>
    %30 = arith.addf %27, %29 : vector<8x128xf32>
    %c0_13 = arith.constant 0 : index
    %c0_14 = arith.constant 0 : index
    %31 = vector.load %arg6[%c0_13, %c0_14] : memref<8x128xf32, #tpu.memory_space<vmem>>, vector<8x128xf32>
    tpu.vector_store %arg6[%c0_13, %c0_14], %30 {strides = array<i32>} : memref<8x128xf32, #tpu.memory_space<vmem>>, vector<8x128xf32>,
    return
  }
  func.func @transform_0(%arg0: i32) -> (i32, i32) {
    %c0_i32 = arith.constant 0 : i32
    %c0_i32_0 = arith.constant 0 : i32
    %c0_i32_1 = arith.constant 0 : i32
    return %c0_i32, %c0_i32_0 : i32, i32
  }
  func.func @transform_1(%arg0: i32) -> (i32, i32) {
    %c0_i32 = arith.constant 0 : i32
    %c0_i32_0 = arith.constant 0 : i32
    %c0_i32_1 = arith.constant 0 : i32
    return %c0_i32, %c0_i32_0 : i32, i32
  }
  func.func @transform_2(%arg0: i32) -> (i32, i32) {
    %c0_i32 = arith.constant 0 : i32
    %c0_i32_0 = arith.constant 0 : i32
    %c0_i32_1 = arith.constant 0 : i32
    return %c0_i32, %c0_i32_0 : i32, i32
  }
  func.func @transform_3(%arg0: i32) -> (i32, i32) {
    %c0_i32 = arith.constant 0 : i32
    %c0_i32_0 = arith.constant 0 : i32
    %c0_i32_1 = arith.constant 0 : i32
    return %c0_i32, %c0_i32_0 : i32, i32
  }
  func.func @transform_4(%arg0: i32) -> (i32, i32) {
    %c0_i32 = arith.constant 0 : i32
    %c0_i32_0 = arith.constant 0 : i32
    %c0_i32_1 = arith.constant 0 : i32
    return %c0_i32, %c0_i32_0 : i32, i32
  }
  func.func @transform_5(%arg0: i32) -> (i32, i32) {
    %c0_i32 = arith.constant 0 : i32
    %c0_i32_0 = arith.constant 0 : i32
    return %arg0, %c0_i32 : i32, i32
  }
}

</mosaic_0001>

<llo_original>
// kernel: tpu_custom_call.1
$region0: #{tpu_custom_call.1}
  #allocation0 [shape = 'u32[]', space=smem, size = 0x4, offset = 0x4, fixed_abs, tag = 'smem constant byte address 0x4 - core index']
  #allocation1 [shape = 'u32[144,128]{1,0:T(1,128)}', space=vmem, size = 0x12000, scoped, tag = 'internal scratch']
  %s0 = inlined_call_operand.hbm [shape: s32[1,128], index: 0, kind: input, shape index: {}]
  %s1 = inlined_call_operand.vmem [shape: s32[1,128], index: 1, kind: input, shape index: {}]
  %s2 = inlined_call_operand.hbm [shape: f32[64,128], index: 2, kind: input, shape index: {}]
  %s3 = inlined_call_operand.hbm [shape: f32[128,128], index: 3, kind: input, shape index: {}]
  %s4 = inlined_call_operand.vmem [shape: f32[1,128], index: 4, kind: input, shape index: {}]
  %s5 = inlined_call_operand.hbm [shape: f32[8,128], index: 5, kind: output, shape index: {}]
  %s6 = sld [smem:[#allocation0]]
  $region42: #{tpu_custom_call.1} parent=0
    _
  %s8 = ssub.s32 1, %s6
  %s9 = scalar_select 0, %s8, %s6
  $region1: #{tpu_custom_call.1} parent=0
    #allocation2 [shape = 'u8[512]{0}', space=vmem, size = 0x400, scoped, tag = 'input window, operand 0, single buffered']
    #allocation3 [shape = 's32[1]{0}', space=sflag, size = 0x4, scoped, tag = 'scoped memory for tpu_custom_call.1']
    #allocation4 [shape = 's32[1]{0}', space=sflag, size = 0x4, scoped, tag = 'scoped memory for tpu_custom_call.1']
    #allocation5 [shape = 'u8[32768]{0}', space=vmem, size = 0x8000, scoped, tag = 'input window, operand 2, single buffered']
    #allocation6 [shape = 's32[1]{0}', space=sflag, size = 0x4, scoped, tag = 'scoped memory for tpu_custom_call.1']
    #allocation7 [shape = 'u8[65536]{0}', space=vmem, size = 0x10000, scoped, tag = 'input window, operand 3, single buffered']
    #allocation8 [shape = 'u8[4096]{0}', space=vmem, size = 0x1000, scoped, tag = 'output window, operand 0, single buffered']
    %10 = vsyncpa [#allocation3], 0
    %11 = vsyncpa [#allocation6], 0
    %12 = vsyncpa [#allocation4], 0
    // Predicated region
    $region2: #{tpu_custom_call.1} parent=1 // pred_check
      _
    $region3: #{tpu_custom_call.1} parent=1 // pred_check_branch
      %14 = sbr.rel (0) target = $region5
    $region4: #{tpu_custom_call.1} parent=1 // pred_region
      %s16 = ssub.s32 16, 16
      %17 = vsyncadd [#allocation3], %s16
      %s19 = sshll.u32 [#allocation2], 4
      %s20 = int_to_ptr.vmem [resolvable:$true] %s19
      %22 = dma.hbm_to_vmem [thread:$0]  %s0, 16, %s20, [#allocation3]
    $region5: #{tpu_custom_call.1} parent=1 // pred_fallthru
      _
    // Predicated region
    $region6: #{tpu_custom_call.1} parent=1 // pred_check
      _
    $region7: #{tpu_custom_call.1} parent=1 // pred_check_branch
      %24 = sbr.rel (0) target = $region9
    $region8: #{tpu_custom_call.1} parent=1 // pred_region
      _
    $region9: #{tpu_custom_call.1} parent=1 // pred_fallthru
      _
    // Predicated region
    $region10: #{tpu_custom_call.1} parent=1 // pred_check
      _
    $region11: #{tpu_custom_call.1} parent=1 // pred_check_branch
      %26 = sbr.rel (0) target = $region13
    $region12: #{tpu_custom_call.1} parent=1 // pred_region
      %s28 = ssub.s32 1024, 1024
      %29 = vsyncadd [#allocation6], %s28
      %s30 = sshll.u32 [#allocation5], 4
      %s31 = int_to_ptr.vmem [resolvable:$true] %s30
      %36 = dma.hbm_to_vmem [thread:$0]  %s2, 1024, %s31, [#allocation6], 128, 128, 8
    $region13: #{tpu_custom_call.1} parent=1 // pred_fallthru
      _
    // Predicated region
    $region14: #{tpu_custom_call.1} parent=1 // pred_check
      _
    $region15: #{tpu_custom_call.1} parent=1 // pred_check_branch
      %38 = sbr.rel (0) target = $region17
    $region16: #{tpu_custom_call.1} parent=1 // pred_region
      %s40 = ssub.s32 2048, 2048
      %41 = vsyncadd [#allocation6], %s40
      %s42 = sshll.u32 [#allocation7], 4
      %s43 = int_to_ptr.vmem [resolvable:$true] %s42
      %48 = dma.hbm_to_vmem [thread:$0]  %s3, 2048, %s43, [#allocation6], 128, 128, 8
    $region17: #{tpu_custom_call.1} parent=1 // pred_fallthru
      _
    // Predicated region
    $region18: #{tpu_custom_call.1} parent=1 // pred_check
      _
    $region19: #{tpu_custom_call.1} parent=1 // pred_check_branch
      %50 = sbr.rel (0) target = $region21
    $region20: #{tpu_custom_call.1} parent=1 // pred_region
      _
    $region21: #{tpu_custom_call.1} parent=1 // pred_fallthru
      _
    // Predicated region
    $region22: #{tpu_custom_call.1} parent=1 // pred_check
      _
    $region23: #{tpu_custom_call.1} parent=1 // pred_check_branch
      %52 = sbr.rel (0) target = $region25
    $region24: #{tpu_custom_call.1} parent=1 // pred_region
      %53 = dma.done [#allocation3], 16
    $region25: #{tpu_custom_call.1} parent=1 // pred_fallthru
      _
    // Predicated region
    $region26: #{tpu_custom_call.1} parent=1 // pred_check
      _
    $region27: #{tpu_custom_call.1} parent=1 // pred_check_branch
      %55 = sbr.rel (0) target = $region29
    $region28: #{tpu_custom_call.1} parent=1 // pred_region
      %56 = dma.done [#allocation6], 1024
    $region29: #{tpu_custom_call.1} parent=1 // pred_fallthru
      _
    // Predicated region
    $region30: #{tpu_custom_call.1} parent=1 // pred_check
      _
    $region31: #{tpu_custom_call.1} parent=1 // pred_check_branch
      %58 = sbr.rel (0) target = $region33
    $region32: #{tpu_custom_call.1} parent=1 // pred_region
      %59 = dma.done [#allocation6], 2048
    $region33: #{tpu_custom_call.1} parent=1 // pred_fallthru
      _
    %v60 = vlaneseq
    %v61 = vshrl.u32 %v60, 7
    %s62 = smul.u32 0, 8
    %v63 = vstv %s62
    %v64 = vadd.s32 %v61, %v63
    %v65 = vld [vmem:[#allocation2] sm:$0x1]
    %v66 = vlaneseq
    %v67 = vshrl.u32 %v66, 7
    %v68 = vsub.s32 0, %v67
    %v69 = vrot.slane %v65, %v68
    %vm70 = vcmp.eq.s32.totalorder %v69, %v64
    %v71 = vsel %vm70, 1, 0
    %v72 = vcvt.s32.f32 %v71
    %73 = vadd.xlane.f32.xlu0 %v72
    %v74 = vpop.xlane.xlu0 %73
    %v75 = vmax.f32 %v74, 1.0
    %v76 = vrcp.pop %v75
    %v77 = vmul.f32 %v72, %v76
    %v78 = vadd.s32 %v61, 8
    %v79 = vadd.s32 %v61, 16
    %v80 = vadd.s32 %v61, 24
    %v81 = vadd.s32 %v61, 32
    %v82 = vadd.s32 %v61, 40
    %v83 = vadd.s32 %v61, 48
    %v84 = vadd.s32 %v61, 56
    %v85 = vld [vmem:[%s1] sm:$0x1]
    %v86 = vlaneseq
    %v87 = vshrl.u32 %v86, 7
    %v88 = vsub.s32 0, %v87
    %v89 = vrot.slane %v85, %v88
    %vm90 = vcmp.eq.s32.totalorder %v89, %v61
    %vm91 = vcmp.eq.s32.totalorder %v89, %v78
    %vm92 = vcmp.eq.s32.totalorder %v89, %v79
    %vm93 = vcmp.eq.s32.totalorder %v89, %v80
    %vm94 = vcmp.eq.s32.totalorder %v89, %v81
    %vm95 = vcmp.eq.s32.totalorder %v89, %v82
    %vm96 = vcmp.eq.s32.totalorder %v89, %v83
    %vm97 = vcmp.eq.s32.totalorder %v89, %v84
    %v98 = vsel %vm90, 1, 0
    %v99 = vsel %vm91, 1, 0
    %v100 = vsel %vm92, 1, 0
    %v101 = vsel %vm93, 1, 0
    %v102 = vsel %vm94, 1, 0
    %v103 = vsel %vm95, 1, 0
    %v104 = vsel %vm96, 1, 0
    %v105 = vsel %vm97, 1, 0
    %v106 = vcvt.s32.f32 %v98
    %v107 = vcvt.s32.f32 %v99
    %v108 = vcvt.s32.f32 %v100
    %v109 = vcvt.s32.f32 %v101
    %v110 = vcvt.s32.f32 %v102
    %v111 = vcvt.s32.f32 %v103
    %v112 = vcvt.s32.f32 %v104
    %v113 = vcvt.s32.f32 %v105
    %114 = vmatprep.subr.mxu0 0.0
    %115 = vmatpush1.xpose.msra.mxu0 %v106
    %116 = vmatprep.subr.mxu0 0.0
    %117 = vmatpush1.xpose.msra.mxu0 %v107
    %118 = vmatprep.subr.mxu0 0.0
    %119 = vmatpush1.xpose.msra.mxu0 %v108
    %120 = vmatprep.subr.mxu0 0.0
    %121 = vmatpush1.xpose.msra.mxu0 %v109
    %122 = vmatprep.subr.mxu0 0.0
    %123 = vmatpush1.xpose.msra.mxu0 %v110
    %124 = vmatprep.subr.mxu0 0.0
    %125 = vmatpush1.xpose.msra.mxu0 %v111
    %126 = vmatprep.subr.mxu0 0.0
    %127 = vmatpush1.xpose.msra.mxu0 %v112
    %128 = vmatprep.subr.mxu0 0.0
    %129 = vmatpush1.xpose.msra.mxu0 %v113
    %130 = vmatprep.subr.mxu0 0.0
    %131 = vmatpush1.xpose.msra.mxu0 0.0
    %132 = vmatprep.subr.mxu0 0.0
    %133 = vmatpush1.xpose.msra.mxu0 0.0
    %134 = vmatprep.subr.mxu0 0.0
    %135 = vmatpush1.xpose.msra.mxu0 0.0
    %136 = vmatprep.subr.mxu0 0.0
    %137 = vmatpush1.xpose.msra.mxu0 0.0
    %138 = vmatprep.subr.mxu0 0.0
    %139 = vmatpush1.xpose.msra.mxu0 0.0
    %140 = vmatprep.subr.mxu0 0.0
    %141 = vmatpush1.xpose.msra.mxu0 0.0
    %142 = vmatprep.subr.mxu0 0.0
    %143 = vmatpush1.xpose.msra.mxu0 0.0
    %144 = vmatprep.subr.mxu0 0.0
    %145 = vmatpush1.xpose.msra.mxu0 0.0
    %146 = vmatprep.subr.mxu0 0.0
    %147 = vmatpush1.xpose.msra.mxu0 0.0
    %148 = vmatprep.subr.mxu0 0.0
    %149 = vmatpush1.xpose.msra.mxu0 0.0
    %150 = vmatprep.subr.mxu0 0.0
    %151 = vmatpush1.xpose.msra.mxu0 0.0
    %152 = vmatprep.subr.mxu0 0.0
    %153 = vmatpush1.xpose.msra.mxu0 0.0
    %154 = vmatprep.subr.mxu0 0.0
    %155 = vmatpush1.xpose.msra.mxu0 0.0
    %156 = vmatprep.subr.mxu0 0.0
    %157 = vmatpush1.xpose.msra.mxu0 0.0
    %158 = vmatprep.subr.mxu0 0.0
    %159 = vmatpush1.xpose.msra.mxu0 0.0
    %160 = vmatprep.subr.mxu0 0.0
    %161 = vmatpush1.xpose.msra.mxu0 0.0
    %162 = vmatprep.subr.mxu0 0.0
    %163 = vmatpush1.xpose.msra.mxu0 0.0
    %164 = vmatprep.subr.mxu0 0.0
    %165 = vmatpush1.xpose.msra.mxu0 0.0
    %166 = vmatprep.subr.mxu0 0.0
    %167 = vmatpush1.xpose.msra.mxu0 0.0
    %168 = vmatprep.subr.mxu0 0.0
    %169 = vmatpush1.xpose.msra.mxu0 0.0
    %170 = vmatprep.subr.mxu0 0.0
    %171 = vmatpush1.xpose.msra.mxu0 0.0
    %172 = vmatprep.subr.mxu0 0.0
    %173 = vmatpush1.xpose.msra.mxu0 0.0
    %174 = vmatprep.subr.mxu0 0.0
    %175 = vmatpush1.xpose.msra.mxu0 0.0
    %176 = vmatprep.subr.mxu0 0.0
    %177 = vmatpush1.xpose.msra.mxu0 0.0
    %178 = vmatprep.mubr.f32.mxu0 0.0
    %179 = vmatmul.mubr.f32.gmra.mrb[0].mxu0 %v77
    %v180 = vpop.f32.mrb[0].mxu0
    %v181 = vadd.f32 0.0, %v180
    %v182 = vpop.f32.mrb[0].mxu0
    %183 = vdwg.mxu0
    %v184 = vld [vmem:[#allocation5] sm:$0xff]
    %v185 = vld [vmem:[#allocation5 + $0x8] sm:$0xff]
    %v186 = vld [vmem:[#allocation5 + $0x10] sm:$0xff]
    %v187 = vld [vmem:[#allocation5 + $0x18] sm:$0xff]
    %v188 = vld [vmem:[#allocation5 + $0x20] sm:$0xff]
    %v189 = vld [vmem:[#allocation5 + $0x28] sm:$0xff]
    %v190 = vld [vmem:[#allocation5 + $0x30] sm:$0xff]
    %v191 = vld [vmem:[#allocation5 + $0x38] sm:$0xff]
    %vm192 = vcmask 523264
    %v194 = vsel %vm192, %v181, 0
    %196 = vmatprep.subr.mxu0 0.0
    %197 = vmatpush1.msra.mxu0 %v184
    %198 = vmatprep.subr.mxu0 0.0
    %199 = vmatpush1.msra.mxu0 %v185
    %200 = vmatprep.subr.mxu0 0.0
    %201 = vmatpush1.msra.mxu0 %v186
    %202 = vmatprep.subr.mxu0 0.0
    %203 = vmatpush1.msra.mxu0 %v187
    %204 = vmatprep.subr.mxu0 0.0
    %205 = vmatpush1.msra.mxu0 %v188
    %206 = vmatprep.subr.mxu0 0.0
    %207 = vmatpush1.msra.mxu0 %v189
    %208 = vmatprep.subr.mxu0 0.0
    %209 = vmatpush1.msra.mxu0 %v190
    %210 = vmatprep.subr.mxu0 0.0
    %211 = vmatpush1.msra.mxu0 %v191
    %212 = vmatprep.subr.mxu0 0.0
    %213 = vmatpush1.msra.mxu0 0.0
    %214 = vmatprep.subr.mxu0 0.0
    %215 = vmatpush1.msra.mxu0 0.0
    %216 = vmatprep.subr.mxu0 0.0
    %217 = vmatpush1.msra.mxu0 0.0
    %218 = vmatprep.subr.mxu0 0.0
    %219 = vmatpush1.msra.mxu0 0.0
    %220 = vmatprep.subr.mxu0 0.0
    %221 = vmatpush1.msra.mxu0 0.0
    %222 = vmatprep.subr.mxu0 0.0
    %223 = vmatpush1.msra.mxu0 0.0
    %224 = vmatprep.subr.mxu0 0.0
    %225 = vmatpush1.msra.mxu0 0.0
    %226 = vmatprep.subr.mxu0 0.0
    %227 = vmatpush1.msra.mxu0 0.0
    %228 = vmatprep.subr.mxu0 0.0
    %229 = vmatpush1.msra.mxu0 0.0
    %230 = vmatprep.subr.mxu0 0.0
    %231 = vmatpush1.msra.mxu0 0.0
    %232 = vmatprep.subr.mxu0 0.0
    %233 = vmatpush1.msra.mxu0 0.0
    %234 = vmatprep.subr.mxu0 0.0
    %235 = vmatpush1.msra.mxu0 0.0
    %236 = vmatprep.subr.mxu0 0.0
    %237 = vmatpush1.msra.mxu0 0.0
    %238 = vmatprep.subr.mxu0 0.0
    %239 = vmatpush1.msra.mxu0 0.0
    %240 = vmatprep.subr.mxu0 0.0
    %241 = vmatpush1.msra.mxu0 0.0
    %242 = vmatprep.subr.mxu0 0.0
    %243 = vmatpush1.msra.mxu0 0.0
    %244 = vmatprep.subr.mxu0 0.0
    %245 = vmatpush1.msra.mxu0 0.0
    %246 = vmatprep.subr.mxu0 0.0
    %247 = vmatpush1.msra.mxu0 0.0
    %248 = vmatprep.subr.mxu0 0.0
    %249 = vmatpush1.msra.mxu0 0.0
    %250 = vmatprep.subr.mxu0 0.0
    %251 = vmatpush1.msra.mxu0 0.0
    %252 = vmatprep.subr.mxu0 0.0
    %253 = vmatpush1.msra.mxu0 0.0
    %254 = vmatprep.subr.mxu0 0.0
    %255 = vmatpush1.msra.mxu0 0.0
    %256 = vmatprep.subr.mxu0 0.0
    %257 = vmatpush1.msra.mxu0 0.0
    %258 = vmatprep.subr.mxu0 0.0
    %259 = vmatpush1.msra.mxu0 0.0
    %260 = vmatprep.mubr.f32.mxu0 0.0
    %261 = vmatmul.mubr.f32.gmra.mrb[0].mxu0 %v194
    %v262 = vpop.f32.mrb[0].mxu0
    %v263 = vadd.f32 0.0, %v262
    %v264 = vpop.f32.mrb[0].mxu0
    %265 = vdwg.mxu0
    %v266 = vld [vmem:[#allocation7] sm:$0xff]
    %v267 = vld [vmem:[#allocation7 + $0x8] sm:$0xff]
    %v268 = vld [vmem:[#allocation7 + $0x10] sm:$0xff]
    %v269 = vld [vmem:[#allocation7 + $0x18] sm:$0xff]
    %v270 = vld [vmem:[#allocation7 + $0x20] sm:$0xff]
    %v271 = vld [vmem:[#allocation7 + $0x28] sm:$0xff]
    %v272 = vld [vmem:[#allocation7 + $0x30] sm:$0xff]
    %v273 = vld [vmem:[#allocation7 + $0x38] sm:$0xff]
    %v274 = vld [vmem:[#allocation7 + $0x40] sm:$0xff]
    %v275 = vld [vmem:[#allocation7 + $0x48] sm:$0xff]
    %v276 = vld [vmem:[#allocation7 + $0x50] sm:$0xff]
    %v277 = vld [vmem:[#allocation7 + $0x58] sm:$0xff]
    %v278 = vld [vmem:[#allocation7 + $0x60] sm:$0xff]
    %v279 = vld [vmem:[#allocation7 + $0x68] sm:$0xff]
    %v280 = vld [vmem:[#allocation7 + $0x70] sm:$0xff]
    %v281 = vld [vmem:[#allocation7 + $0x78] sm:$0xff]
    %v282 = vld [vmem:[%s4] sm:$0x1]
    %v284 = vlaneseq
    %v285 = vshrl.u32 %v284, 7
    %v286 = vsub.s32 0, %v285
    %v287 = vrot.slane %v282, %v286
    %289 = vmatprep.subr.mxu0 0.0
    %290 = vmatpush1.msra.mxu0 %v266
    %291 = vmatprep.subr.mxu0 0.0
    %292 = vmatpush1.msra.mxu0 %v267
    %293 = vmatprep.subr.mxu0 0.0
    %294 = vmatpush1.msra.mxu0 %v268
    %295 = vmatprep.subr.mxu0 0.0
    %296 = vmatpush1.msra.mxu0 %v269
    %297 = vmatprep.subr.mxu0 0.0
    %298 = vmatpush1.msra.mxu0 %v270
    %299 = vmatprep.subr.mxu0 0.0
    %300 = vmatpush1.msra.mxu0 %v271
    %301 = vmatprep.subr.mxu0 0.0
    %302 = vmatpush1.msra.mxu0 %v272
    %303 = vmatprep.subr.mxu0 0.0
    %304 = vmatpush1.msra.mxu0 %v273
    %305 = vmatprep.subr.mxu0 0.0
    %306 = vmatpush1.msra.mxu0 %v274
    %307 = vmatprep.subr.mxu0 0.0
    %308 = vmatpush1.msra.mxu0 %v275
    %309 = vmatprep.subr.mxu0 0.0
    %310 = vmatpush1.msra.mxu0 %v276
    %311 = vmatprep.subr.mxu0 0.0
    %312 = vmatpush1.msra.mxu0 %v277
    %313 = vmatprep.subr.mxu0 0.0
    %314 = vmatpush1.msra.mxu0 %v278
    %315 = vmatprep.subr.mxu0 0.0
    %316 = vmatpush1.msra.mxu0 %v279
    %317 = vmatprep.subr.mxu0 0.0
    %318 = vmatpush1.msra.mxu0 %v280
    %319 = vmatprep.subr.mxu0 0.0
    %320 = vmatpush1.msra.mxu0 %v281
    %321 = vmatprep.subr.mxu0 0.0
    %322 = vmatpush1.msra.mxu0 0.0
    %323 = vmatprep.subr.mxu0 0.0
    %324 = vmatpush1.msra.mxu0 0.0
    %325 = vmatprep.subr.mxu0 0.0
    %326 = vmatpush1.msra.mxu0 0.0
    %327 = vmatprep.subr.mxu0 0.0
    %328 = vmatpush1.msra.mxu0 0.0
    %329 = vmatprep.subr.mxu0 0.0
    %330 = vmatpush1.msra.mxu0 0.0
    %331 = vmatprep.subr.mxu0 0.0
    %332 = vmatpush1.msra.mxu0 0.0
    %333 = vmatprep.subr.mxu0 0.0
    %334 = vmatpush1.msra.mxu0 0.0
    %335 = vmatprep.subr.mxu0 0.0
    %336 = vmatpush1.msra.mxu0 0.0
    %337 = vmatprep.subr.mxu0 0.0
    %338 = vmatpush1.msra.mxu0 0.0
    %339 = vmatprep.subr.mxu0 0.0
    %340 = vmatpush1.msra.mxu0 0.0
    %341 = vmatprep.subr.mxu0 0.0
    %342 = vmatpush1.msra.mxu0 0.0
    %343 = vmatprep.subr.mxu0 0.0
    %344 = vmatpush1.msra.mxu0 0.0
    %345 = vmatprep.subr.mxu0 0.0
    %346 = vmatpush1.msra.mxu0 0.0
    %347 = vmatprep.subr.mxu0 0.0
    %348 = vmatpush1.msra.mxu0 0.0
    %349 = vmatprep.subr.mxu0 0.0
    %350 = vmatpush1.msra.mxu0 0.0
    %351 = vmatprep.subr.mxu0 0.0
    %352 = vmatpush1.msra.mxu0 0.0
    %353 = vmatprep.mubr.f32.mxu0 0.0
    %354 = vmatmul.mubr.f32.gmra.mrb[0].mxu0 %v263
    %v355 = vpop.f32.mrb[0].mxu0
    %v356 = vadd.f32 %v287, %v355
    %v357 = vpop.f32.mrb[0].mxu0
    %358 = vdwg.mxu0
    %359 = vst [vmem:[#allocation8] sm:$0xff] %v356
    // Predicated region
    $region34: #{tpu_custom_call.1} parent=1 // pred_check
      _
    $region35: #{tpu_custom_call.1} parent=1 // pred_check_branch
      %361 = sbr.rel (0) target = $region37
    $region36: #{tpu_custom_call.1} parent=1 // pred_region
      %s363 = ssub.s32 128, 128
      %364 = vsyncadd [#allocation4], %s363
      %s366 = sshll.u32 [#allocation8], 4
      %s367 = int_to_ptr.vmem [resolvable:$true] %s366
      %369 = dma.vmem_to_hbm [thread:$0]  %s367, 128, %s5, [#allocation4]
    $region37: #{tpu_custom_call.1} parent=1 // pred_fallthru
      _
    // Predicated region
    $region38: #{tpu_custom_call.1} parent=1 // pred_check
      _
    $region39: #{tpu_custom_call.1} parent=1 // pred_check_branch
      %371 = sbr.rel (0) target = $region41
    $region40: #{tpu_custom_call.1} parent=1 // pred_region
      %372 = dma.done [#allocation4], 128
    $region41: #{tpu_custom_call.1} parent=1 // pred_fallthru
      _
    %373 = vsyncpa [#allocation3], 1
    %374 = vsyncpa [#allocation6], 1
    %375 = vsyncpa [#allocation4], 1

</llo_original>
